<compile_context>
chip_gen: v5e
topology: v5e:2x2
jax: 0.10.0
libtpu: 0.0.40
codegen_flags: <defaults>
</compile_context>

<pallas_src>
import jax
import jax.numpy as jnp
from jax import lax
from jax.experimental import pallas as pl
from jax.experimental.pallas import tpu as pltpu


def basic_block_kernel(x_ref, m1_ref, s1_ref, b1_ref, m2_ref, s2_ref, b2_ref, out_ref):
    # x_ref   : (1, H, W*C)  f32, lane-dense folded NHWC activation (one image)
    # m1/m2   : (3*W*C, W*C) bf16, 3x3 conv lowered to a banded matrix (see wrapper)
    # s*/b*   : (1, W*C)     f32, folded BN scale / bias tiled over W
    # out_ref : (1, H, W*C)  f32
    H = out_ref.shape[1]
    WC = out_ref.shape[2]

    x2d = x_ref[0]                                        # (H, WC) f32, lane-dense
    zrow = jnp.zeros((1, WC), jnp.float32)

    def conv3x3(a2d, m_ref):
        # pad=1 along H via two zero rows (kept in registers, no VMEM scratch);
        # pad=1 along W is already folded into the weight matrix.
        ap = jnp.concatenate([zrow, a2d, zrow], axis=0)   # (H+2, WC)
        lhs = jnp.concatenate(
            [ap[0:H, :], ap[1:H + 1, :], ap[2:H + 2, :]], axis=1)  # (H, 3*WC)
        # single MXU push per conv, bf16 operands, f32 accumulation
        return jnp.dot(lhs.astype(jnp.bfloat16), m_ref[...],
                       preferred_element_type=jnp.float32)         # (H, WC)

    # conv1 -> BN1 -> ReLU   (all elementwise math in f32)
    y1 = conv3x3(x2d, m1_ref)
    y1 = jnp.maximum(y1 * s1_ref[...] + b1_ref[...], 0.0)

    # conv2 -> BN2
    y2 = conv3x3(y1, m2_ref)
    y2 = y2 * s2_ref[...] + b2_ref[...]

    # residual add (identity path, f32) + final ReLU; lane-dense full-width store
    out_ref[0] = jnp.maximum(y2 + x2d, 0.0).astype(out_ref.dtype)


def _conv3x3_as_matrix(w_oihw, W):
    """Lower a 3x3 / stride-1 / pad-1 conv weight (OIHW) to a banded matrix M of
    shape (3*W*Cin, W*Cout) such that, with L[h, kh*W*Cin + wp*Cin + ci] =
    xpad[h+kh-1, wp, ci] (rows zero-padded, columns NOT padded), out = L @ M gives
    the conv output in folded (H, W*Cout) layout. Column padding is implicit: the
    out-of-range taps are simply absent (they would multiply zeros)."""
    w_hwio = jnp.transpose(w_oihw, (2, 3, 1, 0)).astype(jnp.float32)  # (3,3,Cin,Cout)
    KH, KW, Cin, Cout = w_hwio.shape
    wp = jnp.arange(W)                      # source column
    wo = jnp.arange(W)                      # destination column
    kw = wp[:, None] - wo[None, :] + 1      # (W, W) tap index along width
    valid = (kw >= 0) & (kw < KW)
    kw_c = jnp.clip(kw, 0, KW - 1)
    blocks = []
    for kh in range(KH):
        sel = w_hwio[kh][kw_c]                               # (W, W, Cin, Cout)
        sel = jnp.where(valid[:, :, None, None], sel, 0.0)
        blk = jnp.transpose(sel, (0, 2, 1, 3)).reshape(W * Cin, W * Cout)
        blocks.append(blk)
    return jnp.concatenate(blocks, axis=0).astype(jnp.bfloat16)   # (3*W*Cin, W*Cout)


def _fold_bn(bn, eps, W):
    """Eval-mode BN folded to scale/bias, tiled over W to match the (W*C) lane fold."""
    gamma, beta, mean, var = bn
    scale = gamma / jnp.sqrt(var + eps)
    bias = beta - mean * scale
    C = gamma.shape[0]
    s = jnp.tile(scale, W).reshape(1, W * C).astype(jnp.float32)
    b = jnp.tile(bias, W).reshape(1, W * C).astype(jnp.float32)
    return s, b


def basic_block(x_nchw, w1_oihw, bn1, w2_oihw, bn2, eps=1e-5):
    """Pallas-backed BasicBlock forward. x_nchw: (N, C, H, W) float32."""
    N, C, H, W = x_nchw.shape
    assert w1_oihw.shape[0] == C and w2_oihw.shape[0] == C, \
        "stride=1 / downsample=None requires inplanes == planes"
    WC = W * C

    # NCHW -> NHWC, then fold (W, C) into a single lane-dense trailing dim.
    # (The NHWC reshape to (N, H, W*C) is a free view of contiguous HBM bytes.)
    # TODO(synk): a real pipeline should keep activations in this folded NHWC layout
    # end-to-end instead of transposing NCHW<->NHWC around every block.
    x = jnp.transpose(x_nchw, (0, 2, 3, 1)).astype(jnp.float32).reshape(N, H, WC)

    m1 = _conv3x3_as_matrix(w1_oihw, W)           # (3*WC, WC) bf16
    m2 = _conv3x3_as_matrix(w2_oihw, W)
    s1, b1 = _fold_bn(bn1, eps, W)
    s2, b2 = _fold_bn(bn2, eps, W)

    out = pl.pallas_call(
        basic_block_kernel,
        out_shape=jax.ShapeDtypeStruct((N, H, WC), jnp.float32),
        grid_spec=pltpu.PrefetchScalarGridSpec(
            num_scalar_prefetch=0,
            grid=(N,),
            in_specs=[
                pl.BlockSpec((1, H, WC), lambda n: (n, 0, 0)),       # x (lane-dense)
                pl.BlockSpec((3 * WC, WC), lambda n: (0, 0)),        # conv1 matrix
                pl.BlockSpec((1, WC), lambda n: (0, 0)),             # bn1 scale
                pl.BlockSpec((1, WC), lambda n: (0, 0)),             # bn1 bias
                pl.BlockSpec((3 * WC, WC), lambda n: (0, 0)),        # conv2 matrix
                pl.BlockSpec((1, WC), lambda n: (0, 0)),             # bn2 scale
                pl.BlockSpec((1, WC), lambda n: (0, 0)),             # bn2 bias
            ],
            out_specs=pl.BlockSpec((1, H, WC), lambda n: (n, 0, 0)),
        ),
        compiler_params=pltpu.CompilerParams(
            dimension_semantics=("parallel",)),      # batch elements -> both TCs on v7x
    )(x, m1, s1, b1, m2, s2, b2)

    return jnp.transpose(out.reshape(N, H, W, C), (0, 3, 1, 2))      # back to NCHW


def basic_block_ref(x, w1, bn1, w2, bn2, eps=1e-5):
    """Pure-JAX f32 reference (NCHW), mirrors the PyTorch forward."""
    def conv(v, w):
        return lax.conv_general_dilated(
            v, w, window_strides=(1, 1), padding=((1, 1), (1, 1)),
            dimension_numbers=("NCHW", "OIHW", "NCHW"))

    def bn(v, p):
        g, b, m, s2 = [t.reshape(1, -1, 1, 1) for t in p]
        return g * (v - m) / jnp.sqrt(s2 + eps) + b

    out = jnp.maximum(bn(conv(x, w1), bn1), 0.0)
    out = bn(conv(out, w2), bn2)
    return jnp.maximum(out + x, 0.0)


if __name__ == "__main__":
    key = jax.random.PRNGKey(0)
    N, C, H, W = 2, 8, 16, 16          # inplanes = planes = 8, stride = 1; W*C = 128
    ks = jax.random.split(key, 11)

    x = jax.random.normal(ks[0], (N, C, H, W), jnp.float32)
    w1 = jax.random.normal(ks[1], (C, C, 3, 3), jnp.float32) * 0.1   # conv1 (OIHW)
    w2 = jax.random.normal(ks[2], (C, C, 3, 3), jnp.float32) * 0.1   # conv2 (OIHW)

    bn1 = (jax.random.uniform(ks[3], (C,), minval=0.5, maxval=1.5),   # gamma
           jax.random.normal(ks[4], (C,), jnp.float32) * 0.1,          # beta
           jax.random.normal(ks[5], (C,), jnp.float32) * 0.1,          # running_mean
           jax.random.uniform(ks[6], (C,), minval=0.5, maxval=1.5))    # running_var
    bn2 = (jax.random.uniform(ks[7], (C,), minval=0.5, maxval=1.5),
           jax.random.normal(ks[8], (C,), jnp.float32) * 0.1,
           jax.random.normal(ks[9], (C,), jnp.float32) * 0.1,
           jax.random.uniform(ks[10], (C,), minval=0.5, maxval=1.5))

    out = jax.block_until_ready(basic_block(x, w1, bn1, w2, bn2))
    ref = jax.block_until_ready(basic_block_ref(x, w1, bn1, w2, bn2))

    assert out.shape == ref.shape == (N, C, H, W)
    # Tolerance accounts for bf16 MXU operands (reference is pure f32).
    assert jnp.allclose(out, ref, atol=5e-2, rtol=5e-2), \
        f"max abs err = {float(jnp.max(jnp.abs(out - ref)))}"
    print("KERNEL_OK")
</pallas_src>

<mosaic_0001>
module attributes {stable_mosaic.version = 11 : i64} {
  func.func @basic_block_kernel(%arg0: i32, %arg1: memref<1x16x128xf32, #tpu.memory_space<vmem>>, %arg2: memref<384x128xbf16, #tpu.memory_space<vmem>>, %arg3: memref<1x128xf32, #tpu.memory_space<vmem>>, %arg4: memref<1x128xf32, #tpu.memory_space<vmem>>, %arg5: memref<384x128xbf16, #tpu.memory_space<vmem>>, %arg6: memref<1x128xf32, #tpu.memory_space<vmem>>, %arg7: memref<1x128xf32, #tpu.memory_space<vmem>>, %arg8: memref<1x16x128xf32, #tpu.memory_space<vmem>>) attributes {dimension_semantics = [#tpu.dimension_semantics<parallel>], iteration_bounds = array<i64: 2>, scalar_prefetch = 0 : i64, scratch_operands = 0 : i64, tpu.core_type = #tpu.core_type<tc>, window_params = [{transform_indices = @transform_0, window_bounds = array<i64: 1, 16, 128>}, {pipeline_mode = #tpu.pipeline_mode<synchronous>, transform_indices = @transform_1, window_bounds = array<i64: 384, 128>}, {pipeline_mode = #tpu.pipeline_mode<synchronous>, transform_indices = @transform_2, window_bounds = array<i64: 1, 128>}, {pipeline_mode = #tpu.pipeline_mode<synchronous>, transform_indices = @transform_3, window_bounds = array<i64: 1, 128>}, {pipeline_mode = #tpu.pipeline_mode<synchronous>, transform_indices = @transform_4, window_bounds = array<i64: 384, 128>}, {pipeline_mode = #tpu.pipeline_mode<synchronous>, transform_indices = @transform_5, window_bounds = array<i64: 1, 128>}, {pipeline_mode = #tpu.pipeline_mode<synchronous>, transform_indices = @transform_6, window_bounds = array<i64: 1, 128>}, {transform_indices = @transform_7, window_bounds = array<i64: 1, 16, 128>}]} {
    %c0 = arith.constant 0 : index
    %c0_0 = arith.constant 0 : index
    %c0_1 = arith.constant 0 : index
    %0 = vector.load %arg1[%c0, %c0_0, %c0_1] : memref<1x16x128xf32, #tpu.memory_space<vmem>>, vector<1x16x128xf32>
    %1 = vector.shape_cast %0 : vector<1x16x128xf32> to vector<16x128xf32>
    %cst = arith.constant 0.000000e+00 : f32
    %2 = vector.broadcast %cst : f32 to vector<1x128xf32>
    %3 = tpu.concatenate %2, %1, %2 in 0 : vector<1x128xf32>, vector<16x128xf32>, vector<1x128xf32> -> vector<18x128xf32>
    %4 = vector.extract_strided_slice %3 {offsets = [0, 0], sizes = [16, 128], strides = [1, 1]} : vector<18x128xf32> to vector<16x128xf32>
    %5 = vector.extract_strided_slice %3 {offsets = [1, 0], sizes = [16, 128], strides = [1, 1]} : vector<18x128xf32> to vector<16x128xf32>
    %6 = vector.extract_strided_slice %3 {offsets = [2, 0], sizes = [16, 128], strides = [1, 1]} : vector<18x128xf32> to vector<16x128xf32>
    %7 = tpu.concatenate %4, %5, %6 in 1 : vector<16x128xf32>, vector<16x128xf32>, vector<16x128xf32> -> vector<16x384xf32>
    %8 = arith.truncf %7 : vector<16x384xf32> to vector<16x384xbf16>
    %c0_2 = arith.constant 0 : index
    %c0_3 = arith.constant 0 : index
    %9 = vector.load %arg2[%c0_2, %c0_3] : memref<384x128xbf16, #tpu.memory_space<vmem>>, vector<384x128xbf16>
    %cst_4 = arith.constant dense<0.000000e+00> : vector<16x128xf32>
    %10 = tpu.matmul %8, %9, %cst_4 {dimension_numbers = #tpu.dot_dimension_numbers<[1], [0], [0], [1], [0, 0, 1, 1], [], []>} : vector<16x384xbf16>, vector<384x128xbf16>, vector<16x128xf32> -> vector<16x128xf32>
    %c0_5 = arith.constant 0 : index
    %c0_6 = arith.constant 0 : index
    %11 = vector.load %arg3[%c0_5, %c0_6] : memref<1x128xf32, #tpu.memory_space<vmem>>, vector<1x128xf32>
    %12 = vector.broadcast %11 : vector<1x128xf32> to vector<16x128xf32>
    %13 = arith.mulf %10, %12 : vector<16x128xf32>
    %c0_7 = arith.constant 0 : index
    %c0_8 = arith.constant 0 : index
    %14 = vector.load %arg4[%c0_7, %c0_8] : memref<1x128xf32, #tpu.memory_space<vmem>>, vector<1x128xf32>
    %15 = vector.broadcast %14 : vector<1x128xf32> to vector<16x128xf32>
    %16 = arith.addf %13, %15 : vector<16x128xf32>
    %cst_9 = arith.constant 0.000000e+00 : f32
    %17 = vector.broadcast %cst_9 : f32 to vector<16x128xf32>
    %18 = arith.maximumf %16, %17 : vector<16x128xf32>
    %19 = tpu.concatenate %2, %18, %2 in 0 : vector<1x128xf32>, vector<16x128xf32>, vector<1x128xf32> -> vector<18x128xf32>
    %20 = vector.extract_strided_slice %19 {offsets = [0, 0], sizes = [16, 128], strides = [1, 1]} : vector<18x128xf32> to vector<16x128xf32>
    %21 = vector.extract_strided_slice %19 {offsets = [1, 0], sizes = [16, 128], strides = [1, 1]} : vector<18x128xf32> to vector<16x128xf32>
    %22 = vector.extract_strided_slice %19 {offsets = [2, 0], sizes = [16, 128], strides = [1, 1]} : vector<18x128xf32> to vector<16x128xf32>
    %23 = tpu.concatenate %20, %21, %22 in 1 : vector<16x128xf32>, vector<16x128xf32>, vector<16x128xf32> -> vector<16x384xf32>
    %24 = arith.truncf %23 : vector<16x384xf32> to vector<16x384xbf16>
    %c0_10 = arith.constant 0 : index
    %c0_11 = arith.constant 0 : index
    %25 = vector.load %arg5[%c0_10, %c0_11] : memref<384x128xbf16, #tpu.memory_space<vmem>>, vector<384x128xbf16>
    %cst_12 = arith.constant dense<0.000000e+00> : vector<16x128xf32>
    %26 = tpu.matmul %24, %25, %cst_12 {dimension_numbers = #tpu.dot_dimension_numbers<[1], [0], [0], [1], [0, 0, 1, 1], [], []>} : vector<16x384xbf16>, vector<384x128xbf16>, vector<16x128xf32> -> vector<16x128xf32>
    %c0_13 = arith.constant 0 : index
    %c0_14 = arith.constant 0 : index
    %27 = vector.load %arg6[%c0_13, %c0_14] : memref<1x128xf32, #tpu.memory_space<vmem>>, vector<1x128xf32>
    %28 = vector.broadcast %27 : vector<1x128xf32> to vector<16x128xf32>
    %29 = arith.mulf %26, %28 : vector<16x128xf32>
    %c0_15 = arith.constant 0 : index
    %c0_16 = arith.constant 0 : index
    %30 = vector.load %arg7[%c0_15, %c0_16] : memref<1x128xf32, #tpu.memory_space<vmem>>, vector<1x128xf32>
    %31 = vector.broadcast %30 : vector<1x128xf32> to vector<16x128xf32>
    %32 = arith.addf %29, %31 : vector<16x128xf32>
    %33 = arith.addf %32, %1 : vector<16x128xf32>
    %cst_17 = arith.constant 0.000000e+00 : f32
    %34 = vector.broadcast %cst_17 : f32 to vector<16x128xf32>
    %35 = arith.maximumf %33, %34 : vector<16x128xf32>
    %c0_18 = arith.constant 0 : index
    %c0_19 = arith.constant 0 : index
    %c0_20 = arith.constant 0 : index
    %36 = vector.load %arg8[%c0_18, %c0_19, %c0_20] : memref<1x16x128xf32, #tpu.memory_space<vmem>>, vector<1x16x128xf32>
    %37 = vector.shape_cast %36 : vector<1x16x128xf32> to vector<16x128xf32>
    %38 = vector.shape_cast %35 : vector<16x128xf32> to vector<1x16x128xf32>
    tpu.vector_store %arg8[%c0_18, %c0_19, %c0_20], %38 {strides = array<i32>} : memref<1x16x128xf32, #tpu.memory_space<vmem>>, vector<1x16x128xf32>,
    return
  }
  func.func @transform_0(%arg0: i32) -> (i32, i32, i32) {
    %c0_i32 = arith.constant 0 : i32
    %c0_i32_0 = arith.constant 0 : i32
    %c0_i32_1 = arith.constant 0 : i32
    return %arg0, %c0_i32, %c0_i32_0 : i32, i32, i32
  }
  func.func @transform_1(%arg0: i32) -> (i32, i32) {
    %c0_i32 = arith.constant 0 : i32
    %c0_i32_0 = arith.constant 0 : i32
    %c0_i32_1 = arith.constant 0 : i32
    return %c0_i32, %c0_i32_0 : i32, i32
  }
  func.func @transform_2(%arg0: i32) -> (i32, i32) {
    %c0_i32 = arith.constant 0 : i32
    %c0_i32_0 = arith.constant 0 : i32
    %c0_i32_1 = arith.constant 0 : i32
    return %c0_i32, %c0_i32_0 : i32, i32
  }
  func.func @transform_3(%arg0: i32) -> (i32, i32) {
    %c0_i32 = arith.constant 0 : i32
    %c0_i32_0 = arith.constant 0 : i32
    %c0_i32_1 = arith.constant 0 : i32
    return %c0_i32, %c0_i32_0 : i32, i32
  }
  func.func @transform_4(%arg0: i32) -> (i32, i32) {
    %c0_i32 = arith.constant 0 : i32
    %c0_i32_0 = arith.constant 0 : i32
    %c0_i32_1 = arith.constant 0 : i32
    return %c0_i32, %c0_i32_0 : i32, i32
  }
  func.func @transform_5(%arg0: i32) -> (i32, i32) {
    %c0_i32 = arith.constant 0 : i32
    %c0_i32_0 = arith.constant 0 : i32
    %c0_i32_1 = arith.constant 0 : i32
    return %c0_i32, %c0_i32_0 : i32, i32
  }
  func.func @transform_6(%arg0: i32) -> (i32, i32) {
    %c0_i32 = arith.constant 0 : i32
    %c0_i32_0 = arith.constant 0 : i32
    %c0_i32_1 = arith.constant 0 : i32
    return %c0_i32, %c0_i32_0 : i32, i32
  }
  func.func @transform_7(%arg0: i32) -> (i32, i32, i32) {
    %c0_i32 = arith.constant 0 : i32
    %c0_i32_0 = arith.constant 0 : i32
    %c0_i32_1 = arith.constant 0 : i32
    return %arg0, %c0_i32, %c0_i32_0 : i32, i32, i32
  }
}

</mosaic_0001>

<llo_original>
// kernel: tpu_custom_call.1
$region0: #{tpu_custom_call.1}
  #allocation0 [shape = 'u32[]', space=smem, size = 0x4, offset = 0x4, fixed_abs, tag = 'smem constant byte address 0x4 - core index']
  #allocation1 [shape = 'u32[72,128]{1,0:T(1,128)}', space=vmem, size = 0x9000, scoped, tag = 'internal scratch']
  %s0 = inlined_call_operand.hbm [shape: f32[2,16,128], index: 0, kind: input, shape index: {}]
  %s1 = inlined_call_operand.hbm [shape: bf16[384,128], index: 1, kind: input, shape index: {}]
  %s2 = inlined_call_operand.vmem [shape: f32[1,128], index: 2, kind: input, shape index: {}]
  %s3 = inlined_call_operand.vmem [shape: f32[1,128], index: 3, kind: input, shape index: {}]
  %s4 = inlined_call_operand.hbm [shape: bf16[384,128], index: 4, kind: input, shape index: {}]
  %s5 = inlined_call_operand.vmem [shape: f32[1,128], index: 5, kind: input, shape index: {}]
  %s6 = inlined_call_operand.vmem [shape: f32[1,128], index: 6, kind: input, shape index: {}]
  %s7 = inlined_call_operand.hbm [shape: f32[2,16,128], index: 7, kind: output, shape index: {}]
  %s8 = sld [smem:[#allocation0]]
  $region73: #{tpu_custom_call.1} parent=0
    _
  %s10 = ssub.s32 1, %s8
  %s11 = scalar_select 0, %s10, %s8
  $region1: #{tpu_custom_call.1} parent=0
    #allocation2 [shape = 'u8[16384]{0}', space=vmem, size = 0x4000, scoped, tag = 'input window, operand 0']
    #allocation3 [shape = 's32[2]{0}', space=sflag, size = 0x8, scoped, tag = 'scoped memory for tpu_custom_call.1']
    #allocation4 [shape = 's32[2]{0}', space=sflag, size = 0x8, scoped, tag = 'scoped memory for tpu_custom_call.1']
    #allocation5 [shape = 'u8[98304]{0}', space=vmem, size = 0x18000, scoped, tag = 'input window, operand 1, single buffered']
    #allocation6 [shape = 's32[1]{0}', space=sflag, size = 0x4, scoped, tag = 'scoped memory for tpu_custom_call.1']
    #allocation7 [shape = 'u8[98304]{0}', space=vmem, size = 0x18000, scoped, tag = 'input window, operand 4, single buffered']
    #allocation8 [shape = 'u8[16384]{0}', space=vmem, size = 0x4000, scoped, tag = 'output window, operand 0']
    %12 = vsyncpa [#allocation3], 0
    %s13 = scalar_lea.sflag [#allocation3], 1
    %14 = vsyncpa %s13, 0
    %15 = vsyncpa [#allocation6], 0
    %16 = vsyncpa [#allocation4], 0
    %s17 = scalar_lea.sflag [#allocation4], 1
    %18 = vsyncpa %s17, 0
    loop: start=0, step=1, limit=4
    $region2: #{tpu_custom_call.1} parent=1 // loop_pre_header
      _
    $region3: #{tpu_custom_call.1} parent=1 // loop_header
      %s20 = sphi 0, %s24
      %p21 = scmp.ge.s32.totalorder %s20, 4
      %s30 = sphi 0, %s32
      %s33 = sphi 0, %s30
      %s34 = sphi 0, %s33
      %s50 = sphi 0, %s34
      %s54 = sphi 0, %s54
      %s56 = sphi 0, %s54
      %s57 = sphi 0, %s56
      %s71 = sphi 0, %s57
      %s75 = sphi 0, %s75
      %s77 = sphi 0, %s75
      %s78 = sphi 0, %s77
      %s92 = sphi 0, %s78
      %s96 = sphi 0, %s96
      %s98 = sphi 0, %s96
      %s99 = sphi 0, %s98
      %s113 = sphi 0, %s99
      %s117 = sphi 0, %s117
      %s119 = sphi 0, %s117
      %s120 = sphi 0, %s119
      %s134 = sphi 0, %s120
      %s138 = sphi 0, %s138
      %s140 = sphi 0, %s138
      %s141 = sphi 0, %s140
      %s155 = sphi 0, %s141
      %s159 = sphi 0, %s159
      %s161 = sphi 0, %s159
      %s162 = sphi 0, %s161
      %s176 = sphi 0, %s162
      %s182 = sphi 0, %s184
      %s185 = sphi 0, %s182
      %s186 = sphi 0, %s185
      %s202 = sphi 0, %s186
    $region4: #{tpu_custom_call.1} parent=1 // loop_header_branch
      %23 = sbr.rel (%p21) target = $region8
    $region5: #{tpu_custom_call.1} parent=1 // loop_body
      %s25 = ssub.s32 %s20, 1
      %s26 = ssub.s32 %s20, 2
      %s27 = sadd.s32 %s20, 1
      %s28 = ssub.s32 %s20, %s27
      %p29 = scmp.eq.s32.totalorder %s28, 0
      %s31 = sadd.s32 %s30, 1
      %s32 = scalar_select %p29, %s30, %s31
      %p35 = pneg %p29
      %p36 = scmp.eq.s32.totalorder %s20, 1
      %p37 = por %p35, %p36
      %p38 = scmp.ne.s32.totalorder %s30, %s33
      %p39 = scmp.eq.s32.totalorder %s20, 0
      %p40 = por %p38, %p39
      %p41 = scmp.ne.s32.totalorder %s30, %s33
      %p42 = scmp.eq.s32.totalorder %s25, 1
      %p43 = por %p41, %p42
      %p44 = scmp.ne.s32.totalorder %s33, %s34
      %p45 = scmp.eq.s32.totalorder %s25, 0
      %p46 = por %p44, %p45
      %p47 = scmp.ne.s32.totalorder %s33, %s34
      %p48 = scmp.eq.s32.totalorder %s26, 1
      %p49 = por %p47, %p48
      %p51 = scmp.ne.s32.totalorder %s34, %s50
      %p52 = scmp.eq.s32.totalorder %s26, 0
      %p53 = por %p51, %p52
      %s55 = sadd.s32 %s54, 1
      %p58 = scmp.eq.s32.totalorder %s20, 1
      %p59 = scmp.ne.s32.totalorder %s54, %s56
      %p60 = scmp.eq.s32.totalorder %s20, 0
      %p61 = por %p59, %p60
      %p62 = scmp.ne.s32.totalorder %s54, %s56
      %p63 = scmp.eq.s32.totalorder %s25, 1
      %p64 = por %p62, %p63
      %p65 = scmp.ne.s32.totalorder %s56, %s57
      %p66 = scmp.eq.s32.totalorder %s25, 0
      %p67 = por %p65, %p66
      %p68 = scmp.ne.s32.totalorder %s56, %s57
      %p69 = scmp.eq.s32.totalorder %s26, 1
      %p70 = por %p68, %p69
      %p72 = scmp.ne.s32.totalorder %s57, %s71
      %p73 = scmp.eq.s32.totalorder %s26, 0
      %p74 = por %p72, %p73
      %s76 = sadd.s32 %s75, 1
      %p79 = scmp.eq.s32.totalorder %s20, 1
      %p80 = scmp.ne.s32.totalorder %s75, %s77
      %p81 = scmp.eq.s32.totalorder %s20, 0
      %p82 = por %p80, %p81
      %p83 = scmp.ne.s32.totalorder %s75, %s77
      %p84 = scmp.eq.s32.totalorder %s25, 1
      %p85 = por %p83, %p84
      %p86 = scmp.ne.s32.totalorder %s77, %s78
      %p87 = scmp.eq.s32.totalorder %s25, 0
      %p88 = por %p86, %p87
      %p89 = scmp.ne.s32.totalorder %s77, %s78
      %p90 = scmp.eq.s32.totalorder %s26, 1
      %p91 = por %p89, %p90
      %p93 = scmp.ne.s32.totalorder %s78, %s92
      %p94 = scmp.eq.s32.totalorder %s26, 0
      %p95 = por %p93, %p94
      %s97 = sadd.s32 %s96, 1
      %p100 = scmp.eq.s32.totalorder %s20, 1
      %p101 = scmp.ne.s32.totalorder %s96, %s98
      %p102 = scmp.eq.s32.totalorder %s20, 0
      %p103 = por %p101, %p102
      %p104 = scmp.ne.s32.totalorder %s96, %s98
      %p105 = scmp.eq.s32.totalorder %s25, 1
      %p106 = por %p104, %p105
      %p107 = scmp.ne.s32.totalorder %s98, %s99
      %p108 = scmp.eq.s32.totalorder %s25, 0
      %p109 = por %p107, %p108
      %p110 = scmp.ne.s32.totalorder %s98, %s99
      %p111 = scmp.eq.s32.totalorder %s26, 1
      %p112 = por %p110, %p111
      %p114 = scmp.ne.s32.totalorder %s99, %s113
      %p115 = scmp.eq.s32.totalorder %s26, 0
      %p116 = por %p114, %p115
      %s118 = sadd.s32 %s117, 1
      %p121 = scmp.eq.s32.totalorder %s20, 1
      %p122 = scmp.ne.s32.totalorder %s117, %s119
      %p123 = scmp.eq.s32.totalorder %s20, 0
      %p124 = por %p122, %p123
      %p125 = scmp.ne.s32.totalorder %s117, %s119
      %p126 = scmp.eq.s32.totalorder %s25, 1
      %p127 = por %p125, %p126
      %p128 = scmp.ne.s32.totalorder %s119, %s120
      %p129 = scmp.eq.s32.totalorder %s25, 0
      %p130 = por %p128, %p129
      %p131 = scmp.ne.s32.totalorder %s119, %s120
      %p132 = scmp.eq.s32.totalorder %s26, 1
      %p133 = por %p131, %p132
      %p135 = scmp.ne.s32.totalorder %s120, %s134
      %p136 = scmp.eq.s32.totalorder %s26, 0
      %p137 = por %p135, %p136
      %s139 = sadd.s32 %s138, 1
      %p142 = scmp.eq.s32.totalorder %s20, 1
      %p143 = scmp.ne.s32.totalorder %s138, %s140
      %p144 = scmp.eq.s32.totalorder %s20, 0
      %p145 = por %p143, %p144
      %p146 = scmp.ne.s32.totalorder %s138, %s140
      %p147 = scmp.eq.s32.totalorder %s25, 1
      %p148 = por %p146, %p147
      %p149 = scmp.ne.s32.totalorder %s140, %s141
      %p150 = scmp.eq.s32.totalorder %s25, 0
      %p151 = por %p149, %p150
      %p152 = scmp.ne.s32.totalorder %s140, %s141
      %p153 = scmp.eq.s32.totalorder %s26, 1
      %p154 = por %p152, %p153
      %p156 = scmp.ne.s32.totalorder %s141, %s155
      %p157 = scmp.eq.s32.totalorder %s26, 0
      %p158 = por %p156, %p157
      %s160 = sadd.s32 %s159, 1
      %p163 = scmp.eq.s32.totalorder %s20, 1
      %p164 = scmp.ne.s32.totalorder %s159, %s161
      %p165 = scmp.eq.s32.totalorder %s20, 0
      %p166 = por %p164, %p165
      %p167 = scmp.ne.s32.totalorder %s159, %s161
      %p168 = scmp.eq.s32.totalorder %s25, 1
      %p169 = por %p167, %p168
      %p170 = scmp.ne.s32.totalorder %s161, %s162
      %p171 = scmp.eq.s32.totalorder %s25, 0
      %p172 = por %p170, %p171
      %p173 = scmp.ne.s32.totalorder %s161, %s162
      %p174 = scmp.eq.s32.totalorder %s26, 1
      %p175 = por %p173, %p174
      %p177 = scmp.ne.s32.totalorder %s162, %s176
      %p178 = scmp.eq.s32.totalorder %s26, 0
      %p179 = por %p177, %p178
      %s180 = ssub.s32 %s20, %s27
      %p181 = scmp.eq.s32.totalorder %s180, 0
      %s183 = sadd.s32 %s182, 1
      %s184 = scalar_select %p181, %s182, %s183
      %p187 = pneg %p181
      %p188 = scmp.eq.s32.totalorder %s20, 1
      %p189 = por %p187, %p188
      %p190 = scmp.ne.s32.totalorder %s182, %s185
      %p191 = scmp.eq.s32.totalorder %s20, 0
      %p192 = por %p190, %p191
      %p193 = scmp.ne.s32.totalorder %s182, %s185
      %p194 = scmp.eq.s32.totalorder %s25, 1
      %p195 = por %p193, %p194
      %p196 = scmp.ne.s32.totalorder %s185, %s186
      %p197 = scmp.eq.s32.totalorder %s25, 0
      %p198 = por %p196, %p197
      %p199 = scmp.ne.s32.totalorder %s185, %s186
      %p200 = scmp.eq.s32.totalorder %s26, 1
      %p201 = por %p199, %p200
      %p203 = scmp.ne.s32.totalorder %s186, %s202
      %p204 = scmp.eq.s32.totalorder %s26, 0
      %p205 = por %p203, %p204
      %p206 = scmp.le.s32.totalorder 1, %s20
      %p207 = scmp.lt.s32.totalorder %s20, 3
      %p208 = pnand %p206, %p207
      %p209 = pneg %p208
      // Predicated region
      $region9: #{tpu_custom_call.1} parent=5 // pred_check
        _
      $region10: #{tpu_custom_call.1} parent=5 // pred_check_branch
        %211 = sbr.rel (%p208) target = $region12
      $region11: #{tpu_custom_call.1} parent=5 // pred_region
        %s212 = ssub.s32 %s20, 1
        // Predicated region
        $region13: #{tpu_custom_call.1} parent=11 // pred_check
          %p213 = pneg %p67
        $region14: #{tpu_custom_call.1} parent=11 // pred_check_branch
          %215 = sbr.rel (%p213) target = $region16
        $region15: #{tpu_custom_call.1} parent=11 // pred_region
          %217 = vsyncadd [#allocation6], 0
          %s218 = sshll.u32 %s1, 4
          %s219 = int_to_ptr.hbm [resolvable:$true] %s218
          %s220 = sshll.u32 [#allocation5], 4
          %s221 = int_to_ptr.vmem [resolvable:$true] %s220
          %226 = dma.hbm_to_vmem [thread:$0]  %s219, 3072, %s221, [#allocation6], 64, 64, 4
        $region16: #{tpu_custom_call.1} parent=11 // pred_fallthru
          _
        // Predicated region
        $region17: #{tpu_custom_call.1} parent=11 // pred_check
          %p227 = pneg %p88
        $region18: #{tpu_custom_call.1} parent=11 // pred_check_branch
          %229 = sbr.rel (%p227) target = $region20
        $region19: #{tpu_custom_call.1} parent=11 // pred_region
          _
        $region20: #{tpu_custom_call.1} parent=11 // pred_fallthru
          _
        // Predicated region
        $region21: #{tpu_custom_call.1} parent=11 // pred_check
          %p230 = pneg %p109
        $region22: #{tpu_custom_call.1} parent=11 // pred_check_branch
          %232 = sbr.rel (%p230) target = $region24
        $region23: #{tpu_custom_call.1} parent=11 // pred_region
          _
        $region24: #{tpu_custom_call.1} parent=11 // pred_fallthru
          _
        // Predicated region
        $region25: #{tpu_custom_call.1} parent=11 // pred_check
          %p233 = pneg %p130
        $region26: #{tpu_custom_call.1} parent=11 // pred_check_branch
          %235 = sbr.rel (%p233) target = $region28
        $region27: #{tpu_custom_call.1} parent=11 // pred_region
          %237 = vsyncadd [#allocation6], 0
          %s238 = sshll.u32 %s4, 4
          %s239 = int_to_ptr.hbm [resolvable:$true] %s238
          %s240 = sshll.u32 [#allocation7], 4
          %s241 = int_to_ptr.vmem [resolvable:$true] %s240
          %246 = dma.hbm_to_vmem [thread:$0]  %s239, 3072, %s241, [#allocation6], 64, 64, 4
        $region28: #{tpu_custom_call.1} parent=11 // pred_fallthru
          _
        // Predicated region
        $region29: #{tpu_custom_call.1} parent=11 // pred_check
          %p247 = pneg %p151
        $region30: #{tpu_custom_call.1} parent=11 // pred_check_branch
          %249 = sbr.rel (%p247) target = $region32
        $region31: #{tpu_custom_call.1} parent=11 // pred_region
          _
        $region32: #{tpu_custom_call.1} parent=11 // pred_fallthru
          _
        // Predicated region
        $region33: #{tpu_custom_call.1} parent=11 // pred_check
          %p250 = pneg %p172
        $region34: #{tpu_custom_call.1} parent=11 // pred_check_branch
          %252 = sbr.rel (%p250) target = $region36
        $region35: #{tpu_custom_call.1} parent=11 // pred_region
          _
        $region36: #{tpu_custom_call.1} parent=11 // pred_fallthru
          _
      $region12: #{tpu_custom_call.1} parent=5 // pred_fallthru
        _
      %p253 = scmp.lt.s32.totalorder %s20, 2
      // Predicated region
      $region37: #{tpu_custom_call.1} parent=5 // pred_check
        %p254 = pneg %p253
      $region38: #{tpu_custom_call.1} parent=5 // pred_check_branch
        %256 = sbr.rel (%p254) target = $region40
      $region39: #{tpu_custom_call.1} parent=5 // pred_region
        // Predicated region
        $region41: #{tpu_custom_call.1} parent=39 // pred_check
          %p257 = pneg %p40
        $region42: #{tpu_custom_call.1} parent=39 // pred_check_branch
          %259 = sbr.rel (%p257) target = $region44
        $region43: #{tpu_custom_call.1} parent=39 // pred_region
          %s260 = sand.u32 %s30, 1
          %s261 = scalar_lea.sflag [#allocation3], %s260
          %s262 = sand.u32 %s30, 1
          %s263 = smul.addr %s262, 16
          %s264 = scalar_lea.vmem [#allocation2], %s263
          %266 = vsyncadd %s261, 0
          %s267 = smul.addr %s20, 2
          %s268 = smul.addr %s267, 8
          %s269 = scalar_lea.hbm %s0, %s268
          %s270 = sshll.u32 %s269, 4
          %s271 = int_to_ptr.hbm [resolvable:$true] %s270
          %s272 = sshll.u32 %s264, 4
          %s273 = int_to_ptr.vmem [resolvable:$true] %s272
          %278 = dma.hbm_to_vmem [thread:$0]  %s271, 256, %s273, %s261, 128, 128, 8
        $region44: #{tpu_custom_call.1} parent=39 // pred_fallthru
          _
      $region40: #{tpu_custom_call.1} parent=5 // pred_fallthru
        _
      %p279 = scmp.le.s32.totalorder 1, %s20
      %p280 = scmp.lt.s32.totalorder %s20, 3
      %p281 = pnand %p279, %p280
      %p282 = pneg %p281
      // Predicated region
      $region45: #{tpu_custom_call.1} parent=5 // pred_check
        _
      $region46: #{tpu_custom_call.1} parent=5 // pred_check_branch
        %284 = sbr.rel (%p281) target = $region48
      $region47: #{tpu_custom_call.1} parent=5 // pred_region
        %s285 = ssub.s32 %s20, 1
        %s286 = sand.u32 %s33, 1
        %s287 = scalar_lea.sflag [#allocation3], %s286
        %s288 = sand.u32 %s33, 1
        %s289 = smul.addr %s288, 16
        %s290 = scalar_lea.vmem [#allocation2], %s289
        // Predicated region
        $region49: #{tpu_custom_call.1} parent=47 // pred_check
          %p291 = pneg %p46
        $region50: #{tpu_custom_call.1} parent=47 // pred_check_branch
          %293 = sbr.rel (%p291) target = $region52
        $region51: #{tpu_custom_call.1} parent=47 // pred_region
          %295 = dma.done %s287, 256
        $region52: #{tpu_custom_call.1} parent=47 // pred_fallthru
          _
        // Predicated region
        $region53: #{tpu_custom_call.1} parent=47 // pred_check
          %p296 = pneg %p67
        $region54: #{tpu_custom_call.1} parent=47 // pred_check_branch
          %298 = sbr.rel (%p296) target = $region56
        $region55: #{tpu_custom_call.1} parent=47 // pred_region
          %300 = dma.done [#allocation6], 3072
        $region56: #{tpu_custom_call.1} parent=47 // pred_fallthru
          _
        // Predicated region
        $region57: #{tpu_custom_call.1} parent=47 // pred_check
          %p301 = pneg %p130
        $region58: #{tpu_custom_call.1} parent=47 // pred_check_branch
          %303 = sbr.rel (%p301) target = $region60
        $region59: #{tpu_custom_call.1} parent=47 // pred_region
          %305 = dma.done [#allocation6], 3072
        $region60: #{tpu_custom_call.1} parent=47 // pred_fallthru
          _
        %s306 = sand.u32 %s33, 1
        %s307 = scalar_lea.sflag [#allocation3], %s306
        %s308 = sand.u32 %s33, 1
        %s309 = smul.addr %s308, 16
        %s310 = scalar_lea.vmem [#allocation2], %s309
        %p311 = pneg %p46
        %p312 = pneg %p43
        %p313 = pneg %p67
        %p314 = pneg %p64
        %p315 = pneg %p88
        %p316 = pneg %p85
        %p317 = pneg %p109
        %p318 = pneg %p106
        %p319 = pneg %p130
        %p320 = pneg %p127
        %p321 = pneg %p151
        %p322 = pneg %p148
        %p323 = pneg %p172
        %p324 = pneg %p169
        %p325 = pneg %p198
        %p326 = pneg %p195
        %s327 = sand.u32 %s185, 1
        %s328 = scalar_lea.sflag [#allocation4], %s327
        %s329 = sand.u32 %s185, 1
        %s330 = smul.addr %s329, 16
        %s331 = scalar_lea.vmem [#allocation8], %s330
        %v332 = vld [vmem:[%s290] sm:$0xff]
        %v333 = vld [vmem:[%s290 + $0x8] sm:$0xff]
        %vm336 = vcmask 1040384
        %v337 = vrot.slane %v332, 7
        %v338 = vrot.slane %v333, 7
        %v339 = vsel %vm336, %v337, %v338
        %v343 = vsel %vm336, 0.0, %v337
        %v344 = vsel %vm336, %v338, 0.0
        %vm347 = vcmask 1046528
        %v348 = vrot.slane %v343, 1
        %v349 = vrot.slane %v339, 1
        %v350 = vsel %vm347, %v348, %v349
        %v351 = vrot.slane %v344, 1
        %v352 = vsel %vm347, %v349, %v351
        %vm355 = vcmask 1045504
        %v356 = vrot.slane %v343, 2
        %v357 = vrot.slane %v339, 2
        %v358 = vsel %vm355, %v356, %v357
        %v359 = vrot.slane %v344, 2
        %v360 = vsel %vm355, %v357, %v359
        %v363 = vpack.c.bf16 %v339, %v343
        %v364 = vpack.c.bf16 %v352, %v350
        %v365 = vpack.c.bf16 %v360, %v358
        %v366 = vld [vmem:[#allocation5] sm:$0xf]
        %v367 = vld [vmem:[#allocation5 + $0x4] sm:$0xf]
        %v368 = vld [vmem:[#allocation5 + $0x8] sm:$0xf]
        %v369 = vld [vmem:[#allocation5 + $0xc] sm:$0xf]
        %v370 = vld [vmem:[#allocation5 + $0x10] sm:$0xf]
        %v371 = vld [vmem:[#allocation5 + $0x14] sm:$0xf]
        %v372 = vld [vmem:[#allocation5 + $0x18] sm:$0xf]
        %v373 = vld [vmem:[#allocation5 + $0x1c] sm:$0xf]
        %v374 = vld [vmem:[#allocation5 + $0x20] sm:$0xf]
        %v375 = vld [vmem:[#allocation5 + $0x24] sm:$0xf]
        %v376 = vld [vmem:[#allocation5 + $0x28] sm:$0xf]
        %v377 = vld [vmem:[#allocation5 + $0x2c] sm:$0xf]
        %v378 = vld [vmem:[#allocation5 + $0x30] sm:$0xf]
        %v379 = vld [vmem:[#allocation5 + $0x34] sm:$0xf]
        %v380 = vld [vmem:[#allocation5 + $0x38] sm:$0xf]
        %v381 = vld [vmem:[#allocation5 + $0x3c] sm:$0xf]
        %v382 = vld [vmem:[#allocation5 + $0x40] sm:$0xf]
        %v383 = vld [vmem:[#allocation5 + $0x44] sm:$0xf]
        %v384 = vld [vmem:[#allocation5 + $0x48] sm:$0xf]
        %v385 = vld [vmem:[#allocation5 + $0x4c] sm:$0xf]
        %v386 = vld [vmem:[#allocation5 + $0x50] sm:$0xf]
        %v387 = vld [vmem:[#allocation5 + $0x54] sm:$0xf]
        %v388 = vld [vmem:[#allocation5 + $0x58] sm:$0xf]
        %v389 = vld [vmem:[#allocation5 + $0x5c] sm:$0xf]
        %v390 = vld [vmem:[#allocation5 + $0x60] sm:$0xf]
        %v391 = vld [vmem:[#allocation5 + $0x64] sm:$0xf]
        %v392 = vld [vmem:[#allocation5 + $0x68] sm:$0xf]
        %v393 = vld [vmem:[#allocation5 + $0x6c] sm:$0xf]
        %v394 = vld [vmem:[#allocation5 + $0x70] sm:$0xf]
        %v395 = vld [vmem:[#allocation5 + $0x74] sm:$0xf]
        %v396 = vld [vmem:[#allocation5 + $0x78] sm:$0xf]
        %v397 = vld [vmem:[#allocation5 + $0x7c] sm:$0xf]
        %v398 = vld [vmem:[#allocation5 + $0x80] sm:$0xf]
        %v399 = vld [vmem:[#allocation5 + $0x84] sm:$0xf]
        %v400 = vld [vmem:[#allocation5 + $0x88] sm:$0xf]
        %v401 = vld [vmem:[#allocation5 + $0x8c] sm:$0xf]
        %v402 = vld [vmem:[#allocation5 + $0x90] sm:$0xf]
        %v403 = vld [vmem:[#allocation5 + $0x94] sm:$0xf]
        %v404 = vld [vmem:[#allocation5 + $0x98] sm:$0xf]
        %v405 = vld [vmem:[#allocation5 + $0x9c] sm:$0xf]
        %v406 = vld [vmem:[#allocation5 + $0xa0] sm:$0xf]
        %v407 = vld [vmem:[#allocation5 + $0xa4] sm:$0xf]
        %v408 = vld [vmem:[#allocation5 + $0xa8] sm:$0xf]
        %v409 = vld [vmem:[#allocation5 + $0xac] sm:$0xf]
        %v410 = vld [vmem:[#allocation5 + $0xb0] sm:$0xf]
        %v411 = vld [vmem:[#allocation5 + $0xb4] sm:$0xf]
        %v412 = vld [vmem:[#allocation5 + $0xb8] sm:$0xf]
        %v413 = vld [vmem:[#allocation5 + $0xbc] sm:$0xf]
        %v462 = vunpack.c.l.b16 %v366
        %v463 = vunpack.c.l.b16 %v367
        %v464 = vunpack.c.l.b16 %v368
        %v465 = vunpack.c.l.b16 %v369
        %v466 = vunpack.c.l.b16 %v370
        %v467 = vunpack.c.l.b16 %v371
        %v468 = vunpack.c.l.b16 %v372
        %v469 = vunpack.c.l.b16 %v373
        %v470 = vunpack.c.l.b16 %v374
        %v471 = vunpack.c.l.b16 %v375
        %v472 = vunpack.c.l.b16 %v376
        %v473 = vunpack.c.l.b16 %v377
        %v474 = vunpack.c.l.b16 %v378
        %v475 = vunpack.c.l.b16 %v379
        %v476 = vunpack.c.l.b16 %v380
        %v477 = vunpack.c.l.b16 %v381
        %v478 = vunpack.c.l.b16 %v382
        %v479 = vunpack.c.l.b16 %v383
        %v480 = vunpack.c.l.b16 %v384
        %v481 = vunpack.c.l.b16 %v385
        %v482 = vunpack.c.l.b16 %v386
        %v483 = vunpack.c.l.b16 %v387
        %v484 = vunpack.c.l.b16 %v388
        %v485 = vunpack.c.l.b16 %v389
        %v486 = vunpack.c.l.b16 %v390
        %v487 = vunpack.c.l.b16 %v391
        %v488 = vunpack.c.l.b16 %v392
        %v489 = vunpack.c.l.b16 %v393
        %v490 = vunpack.c.l.b16 %v394
        %v491 = vunpack.c.l.b16 %v395
        %v492 = vunpack.c.l.b16 %v396
        %v493 = vunpack.c.l.b16 %v397
        %v494 = vunpack.c.l.b16 %v398
        %v495 = vunpack.c.l.b16 %v399
        %v496 = vunpack.c.l.b16 %v400
        %v497 = vunpack.c.l.b16 %v401
        %v498 = vunpack.c.l.b16 %v402
        %v499 = vunpack.c.l.b16 %v403
        %v500 = vunpack.c.l.b16 %v404
        %v501 = vunpack.c.l.b16 %v405
        %v502 = vunpack.c.l.b16 %v406
        %v503 = vunpack.c.l.b16 %v407
        %v504 = vunpack.c.l.b16 %v408
        %v505 = vunpack.c.l.b16 %v409
        %v506 = vunpack.c.l.b16 %v410
        %v507 = vunpack.c.l.b16 %v411
        %v508 = vunpack.c.l.b16 %v412
        %v509 = vunpack.c.l.b16 %v413
        %v510 = vpack.c.b16 %v463, %v462
        %v511 = vpack.c.b16 %v465, %v464
        %v512 = vpack.c.b16 %v467, %v466
        %v513 = vpack.c.b16 %v469, %v468
        %v514 = vpack.c.b16 %v471, %v470
        %v515 = vpack.c.b16 %v473, %v472
        %v516 = vpack.c.b16 %v475, %v474
        %v517 = vpack.c.b16 %v477, %v476
        %v518 = vpack.c.b16 %v479, %v478
        %v519 = vpack.c.b16 %v481, %v480
        %v520 = vpack.c.b16 %v483, %v482
        %v521 = vpack.c.b16 %v485, %v484
        %v522 = vpack.c.b16 %v487, %v486
        %v523 = vpack.c.b16 %v489, %v488
        %v524 = vpack.c.b16 %v491, %v490
        %v525 = vpack.c.b16 %v493, %v492
        %v526 = vpack.c.b16 %v495, %v494
        %v527 = vpack.c.b16 %v497, %v496
        %v528 = vpack.c.b16 %v499, %v498
        %v529 = vpack.c.b16 %v501, %v500
        %v530 = vpack.c.b16 %v503, %v502
        %v531 = vpack.c.b16 %v505, %v504
        %v532 = vpack.c.b16 %v507, %v506
        %v533 = vpack.c.b16 %v509, %v508
        %558 = vmatpush.bf16.msra.mxu0 %v517
        %559 = vmatpush.bf16.msra.mxu0 %v516
        %560 = vmatpush.bf16.msra.mxu0 %v515
        %561 = vmatpush.bf16.msra.mxu0 %v514
        %562 = vmatpush.bf16.msra.mxu0 %v513
        %563 = vmatpush.bf16.msra.mxu0 %v512
        %564 = vmatpush.bf16.msra.mxu0 %v511
        %565 = vmatpush.bf16.msra.mxu0 %v510
        %566 = vmatmul.bf16.gmra.mxu0 %v363
        %v567 = vpop.f32.mrf.mxu0
        %v568 = vadd.f32 0.0, %v567
        %v569 = vpop.f32.mrf.mxu0
        %v570 = vadd.f32 0.0, %v569
        %571 = vdwg.mxu0
        %572 = vmatpush.bf16.msra.mxu0 %v525
        %573 = vmatpush.bf16.msra.mxu0 %v524
        %574 = vmatpush.bf16.msra.mxu0 %v523
        %575 = vmatpush.bf16.msra.mxu0 %v522
        %576 = vmatpush.bf16.msra.mxu0 %v521
        %577 = vmatpush.bf16.msra.mxu0 %v520
        %578 = vmatpush.bf16.msra.mxu0 %v519
        %579 = vmatpush.bf16.msra.mxu0 %v518
        %580 = vmatmul.bf16.gmra.mxu0 %v364
        %v581 = vpop.f32.mrf.mxu0
        %v582 = vadd.f32 %v568, %v581
        %v583 = vpop.f32.mrf.mxu0
        %v584 = vadd.f32 %v570, %v583
        %585 = vdwg.mxu0
        %586 = vmatpush.bf16.msra.mxu0 %v533
        %587 = vmatpush.bf16.msra.mxu0 %v532
        %588 = vmatpush.bf16.msra.mxu0 %v531
        %589 = vmatpush.bf16.msra.mxu0 %v530
        %590 = vmatpush.bf16.msra.mxu0 %v529
        %591 = vmatpush.bf16.msra.mxu0 %v528
        %592 = vmatpush.bf16.msra.mxu0 %v527
        %593 = vmatpush.bf16.msra.mxu0 %v526
        %594 = vmatmul.bf16.gmra.mxu0 %v365
        %v595 = vpop.f32.mrf.mxu0
        %v596 = vadd.f32 %v582, %v595
        %v597 = vpop.f32.mrf.mxu0
        %v598 = vadd.f32 %v584, %v597
        %599 = vdwg.mxu0
        %v600 = vld [vmem:[%s2] sm:$0x1]
        %v602 = vperm.slane %v600, 0
        %v604 = vmul.f32 %v596, %v602
        %v605 = vmul.f32 %v598, %v602
        %v606 = vld [vmem:[%s3] sm:$0x1]
        %v608 = vperm.slane %v606, 0
        %v610 = vadd.f32 %v604, %v608
        %v611 = vadd.f32 %v605, %v608
        %v612 = vmax.f32 %v610, 0.0
        %v613 = vmax.f32 %v611, 0.0
        %v616 = vrot.slane %v612, 7
        %v617 = vrot.slane %v613, 7
        %v618 = vsel %vm336, %v616, %v617
        %v622 = vsel %vm336, 0.0, %v616
        %v623 = vsel %vm336, %v617, 0.0
        %v626 = vrot.slane %v622, 1
        %v627 = vrot.slane %v618, 1
        %v628 = vsel %vm347, %v626, %v627
        %v629 = vrot.slane %v623, 1
        %v630 = vsel %vm347, %v627, %v629
        %v633 = vrot.slane %v622, 2
        %v634 = vrot.slane %v618, 2
        %v635 = vsel %vm355, %v633, %v634
        %v636 = vrot.slane %v623, 2
        %v637 = vsel %vm355, %v634, %v636
        %v640 = vpack.c.bf16 %v618, %v622
        %v641 = vpack.c.bf16 %v630, %v628
        %v642 = vpack.c.bf16 %v637, %v635
        %v643 = vld [vmem:[#allocation7] sm:$0xf]
        %v644 = vld [vmem:[#allocation7 + $0x4] sm:$0xf]
        %v645 = vld [vmem:[#allocation7 + $0x8] sm:$0xf]
        %v646 = vld [vmem:[#allocation7 + $0xc] sm:$0xf]
        %v647 = vld [vmem:[#allocation7 + $0x10] sm:$0xf]
        %v648 = vld [vmem:[#allocation7 + $0x14] sm:$0xf]
        %v649 = vld [vmem:[#allocation7 + $0x18] sm:$0xf]
        %v650 = vld [vmem:[#allocation7 + $0x1c] sm:$0xf]
        %v651 = vld [vmem:[#allocation7 + $0x20] sm:$0xf]
        %v652 = vld [vmem:[#allocation7 + $0x24] sm:$0xf]
        %v653 = vld [vmem:[#allocation7 + $0x28] sm:$0xf]
        %v654 = vld [vmem:[#allocation7 + $0x2c] sm:$0xf]
        %v655 = vld [vmem:[#allocation7 + $0x30] sm:$0xf]
        %v656 = vld [vmem:[#allocation7 + $0x34] sm:$0xf]
        %v657 = vld [vmem:[#allocation7 + $0x38] sm:$0xf]
        %v658 = vld [vmem:[#allocation7 + $0x3c] sm:$0xf]
        %v659 = vld [vmem:[#allocation7 + $0x40] sm:$0xf]
        %v660 = vld [vmem:[#allocation7 + $0x44] sm:$0xf]
        %v661 = vld [vmem:[#allocation7 + $0x48] sm:$0xf]
        %v662 = vld [vmem:[#allocation7 + $0x4c] sm:$0xf]
        %v663 = vld [vmem:[#allocation7 + $0x50] sm:$0xf]
        %v664 = vld [vmem:[#allocation7 + $0x54] sm:$0xf]
        %v665 = vld [vmem:[#allocation7 + $0x58] sm:$0xf]
        %v666 = vld [vmem:[#allocation7 + $0x5c] sm:$0xf]
        %v667 = vld [vmem:[#allocation7 + $0x60] sm:$0xf]
        %v668 = vld [vmem:[#allocation7 + $0x64] sm:$0xf]
        %v669 = vld [vmem:[#allocation7 + $0x68] sm:$0xf]
        %v670 = vld [vmem:[#allocation7 + $0x6c] sm:$0xf]
        %v671 = vld [vmem:[#allocation7 + $0x70] sm:$0xf]
        %v672 = vld [vmem:[#allocation7 + $0x74] sm:$0xf]
        %v673 = vld [vmem:[#allocation7 + $0x78] sm:$0xf]
        %v674 = vld [vmem:[#allocation7 + $0x7c] sm:$0xf]
        %v675 = vld [vmem:[#allocation7 + $0x80] sm:$0xf]
        %v676 = vld [vmem:[#allocation7 + $0x84] sm:$0xf]
        %v677 = vld [vmem:[#allocation7 + $0x88] sm:$0xf]
        %v678 = vld [vmem:[#allocation7 + $0x8c] sm:$0xf]
        %v679 = vld [vmem:[#allocation7 + $0x90] sm:$0xf]
        %v680 = vld [vmem:[#allocation7 + $0x94] sm:$0xf]
        %v681 = vld [vmem:[#allocation7 + $0x98] sm:$0xf]
        %v682 = vld [vmem:[#allocation7 + $0x9c] sm:$0xf]
        %v683 = vld [vmem:[#allocation7 + $0xa0] sm:$0xf]
        %v684 = vld [vmem:[#allocation7 + $0xa4] sm:$0xf]
        %v685 = vld [vmem:[#allocation7 + $0xa8] sm:$0xf]
        %v686 = vld [vmem:[#allocation7 + $0xac] sm:$0xf]
        %v687 = vld [vmem:[#allocation7 + $0xb0] sm:$0xf]
        %v688 = vld [vmem:[#allocation7 + $0xb4] sm:$0xf]
        %v689 = vld [vmem:[#allocation7 + $0xb8] sm:$0xf]
        %v690 = vld [vmem:[#allocation7 + $0xbc] sm:$0xf]
        %v739 = vunpack.c.l.b16 %v643
        %v740 = vunpack.c.l.b16 %v644
        %v741 = vunpack.c.l.b16 %v645
        %v742 = vunpack.c.l.b16 %v646
        %v743 = vunpack.c.l.b16 %v647
        %v744 = vunpack.c.l.b16 %v648
        %v745 = vunpack.c.l.b16 %v649
        %v746 = vunpack.c.l.b16 %v650
        %v747 = vunpack.c.l.b16 %v651
        %v748 = vunpack.c.l.b16 %v652
        %v749 = vunpack.c.l.b16 %v653
        %v750 = vunpack.c.l.b16 %v654
        %v751 = vunpack.c.l.b16 %v655
        %v752 = vunpack.c.l.b16 %v656
        %v753 = vunpack.c.l.b16 %v657
        %v754 = vunpack.c.l.b16 %v658
        %v755 = vunpack.c.l.b16 %v659
        %v756 = vunpack.c.l.b16 %v660
        %v757 = vunpack.c.l.b16 %v661
        %v758 = vunpack.c.l.b16 %v662
        %v759 = vunpack.c.l.b16 %v663
        %v760 = vunpack.c.l.b16 %v664
        %v761 = vunpack.c.l.b16 %v665
        %v762 = vunpack.c.l.b16 %v666
        %v763 = vunpack.c.l.b16 %v667
        %v764 = vunpack.c.l.b16 %v668
        %v765 = vunpack.c.l.b16 %v669
        %v766 = vunpack.c.l.b16 %v670
        %v767 = vunpack.c.l.b16 %v671
        %v768 = vunpack.c.l.b16 %v672
        %v769 = vunpack.c.l.b16 %v673
        %v770 = vunpack.c.l.b16 %v674
        %v771 = vunpack.c.l.b16 %v675
        %v772 = vunpack.c.l.b16 %v676
        %v773 = vunpack.c.l.b16 %v677
        %v774 = vunpack.c.l.b16 %v678
        %v775 = vunpack.c.l.b16 %v679
        %v776 = vunpack.c.l.b16 %v680
        %v777 = vunpack.c.l.b16 %v681
        %v778 = vunpack.c.l.b16 %v682
        %v779 = vunpack.c.l.b16 %v683
        %v780 = vunpack.c.l.b16 %v684
        %v781 = vunpack.c.l.b16 %v685
        %v782 = vunpack.c.l.b16 %v686
        %v783 = vunpack.c.l.b16 %v687
        %v784 = vunpack.c.l.b16 %v688
        %v785 = vunpack.c.l.b16 %v689
        %v786 = vunpack.c.l.b16 %v690
        %v787 = vpack.c.b16 %v740, %v739
        %v788 = vpack.c.b16 %v742, %v741
        %v789 = vpack.c.b16 %v744, %v743
        %v790 = vpack.c.b16 %v746, %v745
        %v791 = vpack.c.b16 %v748, %v747
        %v792 = vpack.c.b16 %v750, %v749
        %v793 = vpack.c.b16 %v752, %v751
        %v794 = vpack.c.b16 %v754, %v753
        %v795 = vpack.c.b16 %v756, %v755
        %v796 = vpack.c.b16 %v758, %v757
        %v797 = vpack.c.b16 %v760, %v759
        %v798 = vpack.c.b16 %v762, %v761
        %v799 = vpack.c.b16 %v764, %v763
        %v800 = vpack.c.b16 %v766, %v765
        %v801 = vpack.c.b16 %v768, %v767
        %v802 = vpack.c.b16 %v770, %v769
        %v803 = vpack.c.b16 %v772, %v771
        %v804 = vpack.c.b16 %v774, %v773
        %v805 = vpack.c.b16 %v776, %v775
        %v806 = vpack.c.b16 %v778, %v777
        %v807 = vpack.c.b16 %v780, %v779
        %v808 = vpack.c.b16 %v782, %v781
        %v809 = vpack.c.b16 %v784, %v783
        %v810 = vpack.c.b16 %v786, %v785
        %835 = vmatpush.bf16.msra.mxu0 %v794
        %836 = vmatpush.bf16.msra.mxu0 %v793
        %837 = vmatpush.bf16.msra.mxu0 %v792
        %838 = vmatpush.bf16.msra.mxu0 %v791
        %839 = vmatpush.bf16.msra.mxu0 %v790
        %840 = vmatpush.bf16.msra.mxu0 %v789
        %841 = vmatpush.bf16.msra.mxu0 %v788
        %842 = vmatpush.bf16.msra.mxu0 %v787
        %843 = vmatmul.bf16.gmra.mxu0 %v640
        %v844 = vpop.f32.mrf.mxu0
        %v845 = vadd.f32 0.0, %v844
        %v846 = vpop.f32.mrf.mxu0
        %v847 = vadd.f32 0.0, %v846
        %848 = vdwg.mxu0
        %849 = vmatpush.bf16.msra.mxu0 %v802
        %850 = vmatpush.bf16.msra.mxu0 %v801
        %851 = vmatpush.bf16.msra.mxu0 %v800
        %852 = vmatpush.bf16.msra.mxu0 %v799
        %853 = vmatpush.bf16.msra.mxu0 %v798
        %854 = vmatpush.bf16.msra.mxu0 %v797
        %855 = vmatpush.bf16.msra.mxu0 %v796
        %856 = vmatpush.bf16.msra.mxu0 %v795
        %857 = vmatmul.bf16.gmra.mxu0 %v641
        %v858 = vpop.f32.mrf.mxu0
        %v859 = vadd.f32 %v845, %v858
        %v860 = vpop.f32.mrf.mxu0
        %v861 = vadd.f32 %v847, %v860
        %862 = vdwg.mxu0
        %863 = vmatpush.bf16.msra.mxu0 %v810
        %864 = vmatpush.bf16.msra.mxu0 %v809
        %865 = vmatpush.bf16.msra.mxu0 %v808
        %866 = vmatpush.bf16.msra.mxu0 %v807
        %867 = vmatpush.bf16.msra.mxu0 %v806
        %868 = vmatpush.bf16.msra.mxu0 %v805
        %869 = vmatpush.bf16.msra.mxu0 %v804
        %870 = vmatpush.bf16.msra.mxu0 %v803
        %871 = vmatmul.bf16.gmra.mxu0 %v642
        %v872 = vpop.f32.mrf.mxu0
        %v873 = vadd.f32 %v859, %v872
        %v874 = vpop.f32.mrf.mxu0
        %v875 = vadd.f32 %v861, %v874
        %876 = vdwg.mxu0
        %v877 = vld [vmem:[%s5] sm:$0x1]
        %v879 = vperm.slane %v877, 0
        %v881 = vmul.f32 %v873, %v879
        %v882 = vmul.f32 %v875, %v879
        %v883 = vld [vmem:[%s6] sm:$0x1]
        %v885 = vperm.slane %v883, 0
        %v887 = vadd.f32 %v881, %v885
        %v888 = vadd.f32 %v882, %v885
        %v889 = vadd.f32 %v887, %v332
        %v890 = vadd.f32 %v888, %v333
        %v891 = vmax.f32 %v889, 0.0
        %v892 = vmax.f32 %v890, 0.0
        %893 = vst [vmem:[%s331] sm:$0xff] %v891
        %894 = vst [vmem:[%s331 + $0x8] sm:$0xff] %v892
        %s895 = sand.u32 %s185, 1
        %s896 = scalar_lea.sflag [#allocation4], %s895
        %s897 = sand.u32 %s185, 1
        %s898 = smul.addr %s897, 16
        %s899 = scalar_lea.vmem [#allocation8], %s898
        // Predicated region
        $region61: #{tpu_custom_call.1} parent=47 // pred_check
          %p900 = pneg %p195
        $region62: #{tpu_custom_call.1} parent=47 // pred_check_branch
          %902 = sbr.rel (%p900) target = $region64
        $region63: #{tpu_custom_call.1} parent=47 // pred_region
          %904 = vsyncadd %s896, 0
          %s905 = smul.addr %s25, 2
          %s906 = smul.addr %s905, 8
          %s907 = scalar_lea.hbm %s7, %s906
          %s908 = sshll.u32 %s899, 4
          %s909 = int_to_ptr.vmem [resolvable:$true] %s908
          %s910 = sshll.u32 %s907, 4
          %s911 = int_to_ptr.hbm [resolvable:$true] %s910
          %916 = dma.vmem_to_hbm [thread:$0]  %s909, 256, %s911, %s896, 128, 128, 8
        $region64: #{tpu_custom_call.1} parent=47 // pred_fallthru
          _
      $region48: #{tpu_custom_call.1} parent=5 // pred_fallthru
        _
      %p917 = scmp.le.s32.totalorder 2, %s20
      // Predicated region
      $region65: #{tpu_custom_call.1} parent=5 // pred_check
        %p918 = pneg %p917
      $region66: #{tpu_custom_call.1} parent=5 // pred_check_branch
        %920 = sbr.rel (%p918) target = $region68
      $region67: #{tpu_custom_call.1} parent=5 // pred_region
        %s921 = ssub.s32 %s20, 2
        // Predicated region
        $region69: #{tpu_custom_call.1} parent=67 // pred_check
          %p922 = pneg %p201
        $region70: #{tpu_custom_call.1} parent=67 // pred_check_branch
          %924 = sbr.rel (%p922) target = $region72
        $region71: #{tpu_custom_call.1} parent=67 // pred_region
          %s925 = sand.u32 %s186, 1
          %s926 = scalar_lea.sflag [#allocation4], %s925
          %s927 = sand.u32 %s186, 1
          %s928 = smul.addr %s927, 16
          %s929 = scalar_lea.vmem [#allocation8], %s928
          %931 = dma.done %s926, 256
        $region72: #{tpu_custom_call.1} parent=67 // pred_fallthru
          _
      $region68: #{tpu_custom_call.1} parent=5 // pred_fallthru
        _
    $region6: #{tpu_custom_call.1} parent=1 // loop_footer
      %s24 = sadd.s32 1, %s20
    $region7: #{tpu_custom_call.1} parent=1 // loop_footer_branch
      %19 = sbr.rel target = $region3
    $region8: #{tpu_custom_call.1} parent=1 // loop_exit
      _
    %932 = vsyncpa [#allocation3], 1
    %s933 = scalar_lea.sflag [#allocation3], 1
    %934 = vsyncpa %s933, 1
    %935 = vsyncpa [#allocation6], 1
    %936 = vsyncpa [#allocation4], 1
    %s937 = scalar_lea.sflag [#allocation4], 1
    %938 = vsyncpa %s937, 1

</llo_original>
